<compile_context>
chip_gen: v6e
topology: v6e:2x2x1
jax: 0.10.0
libtpu: 0.0.40
codegen_flags: <defaults>
</compile_context>

<pallas_src>
import functools

import jax
import jax.numpy as jnp
from jax.experimental import pallas as pl
from jax.experimental.pallas import tpu as pltpu

LANES = 128
SUBLANES = 8
MAX_TILE_ROWS = 8192        # (8192, 128) f32 = 4 MiB per pipelined input buffer
CHUNK_ROWS = 512            # inner accumulation chunk: bounds VMEM temporaries
NUM_GROUPS = 2              # leading "parallel" grid axis (v7x has 2 TensorCores)
N_STATS = 8
STAT_ROWS = N_STATS * SUBLANES          # 64 output rows (x 128 lanes) per group
VMEM_LIMIT_BYTES = 40 * 1024 * 1024


def _sublane_multiple(dtype) -> int:
    """Second-minor tiling multiple for a dtype: 8 (32-bit), 16 (bf16), 32 (int8)."""
    itemsize = jnp.dtype(dtype).itemsize
    return SUBLANES * max(1, 4 // itemsize)


def _dice_bce_stats_kernel(p_ref, t_ref, out_ref,
                           s_p, s_t, s_pt, s_l1mp, s_tdl, s_dl, s_tmin, s_tmax,
                           *, tile_rows, chunk_rows, tiles_per_group):
    """Accumulates per-group partial statistics of the DiceBCE loss.

    p_ref, t_ref : VMEM (tile_rows, 128) tiles, native dtype.
    out_ref      : VMEM (64, 128) f32: 8 stats x (8,128) partials for this group.
    s_*          : VMEM (8, 128) f32 accumulators, persistent across the group.
    """
    j = pl.program_id(1)          # reduction ("arbitrary") axis within the group

    @pl.when(j == 0)
    def _init():
        zero = jnp.zeros((SUBLANES, LANES), jnp.float32)
        for ref in (s_p, s_t, s_pt, s_l1mp, s_tdl, s_dl):
            ref[...] = zero
        s_tmin[...] = jnp.full((SUBLANES, LANES), jnp.inf, jnp.float32)
        s_tmax[...] = jnp.full((SUBLANES, LANES), -jnp.inf, jnp.float32)

    def accum(row0, nrows):
        # Native-dtype load + in-kernel upcast: free VPU work, and it halves(+)
        # the HBM bytes vs. a wrapper-side f32 cast for bf16/int8 inputs.
        p = p_ref[pl.ds(row0, nrows), :].astype(jnp.float32)
        t = t_ref[pl.ds(row0, nrows), :].astype(jnp.float32)
        # torch.nn.BCELoss clamps its log terms at -100; clamp before any use
        # so p in {0, 1} stays finite.
        log_p = jnp.maximum(jnp.log(p), -100.0)
        log_1mp = jnp.maximum(jnp.log(1.0 - p), -100.0)
        dlog = log_p - log_1mp

        def vacc(x):   # (nrows,128) -> (8,128) partial sum: pure VALU vreg adds
            return jnp.sum(x.reshape(nrows // SUBLANES, SUBLANES, LANES), axis=0)

        s_p[...] += vacc(p)
        s_t[...] += vacc(t)
        s_pt[...] += vacc(p * t)
        s_l1mp[...] += vacc(log_1mp)
        s_tdl[...] += vacc(t * dlog)
        s_dl[...] += vacc(dlog)
        t3 = t.reshape(nrows // SUBLANES, SUBLANES, LANES)
        s_tmin[...] = jnp.minimum(s_tmin[...], jnp.min(t3, axis=0))
        s_tmax[...] = jnp.maximum(s_tmax[...], jnp.max(t3, axis=0))

    # Chunked accumulation: elementwise temporaries stay O(chunk_rows x 128)
    # regardless of the DMA block size (keeps v7x's 64 MiB VMEM comfortable).
    n_full, rem_rows = divmod(tile_rows, chunk_rows)
    if n_full > 1:
        @pl.loop(0, n_full)
        def _chunks(c):
            accum(pl.multiple_of(c * chunk_rows, chunk_rows), chunk_rows)
    elif n_full == 1:
        accum(0, chunk_rows)
    if rem_rows:
        accum(n_full * chunk_rows, rem_rows)

    @pl.when(j == tiles_per_group - 1)
    def _flush():
        for k, ref in enumerate(
                (s_p, s_t, s_pt, s_l1mp, s_tdl, s_dl, s_tmin, s_tmax)):
            out_ref[k * SUBLANES:(k + 1) * SUBLANES, :] = ref[...]


def _stats_jnp(p, t):
    """Pure-JAX partial statistics (ragged tail / tiny-input fallback)."""
    p = p.astype(jnp.float32)
    t = t.astype(jnp.float32)
    log_1mp = jnp.maximum(jnp.log(1.0 - p), -100.0)
    dlog = jnp.maximum(jnp.log(p), -100.0) - log_1mp
    return (jnp.sum(p), jnp.sum(t), jnp.sum(p * t), jnp.sum(log_1mp),
            jnp.sum(t * dlog), jnp.sum(dlog), jnp.min(t), jnp.max(t))


def _finalize(sum_p, sum_t, sum_pt, sum_l1mp, sum_tdl, sum_dl, t_min, t_max, n):
    """O(1) finalize: fold the conditional renormalization into an affine map
    t' = scale*t + shift and emit 0.5*BCE + 0.5*Dice from global sums."""
    nf = jnp.float32(n)
    needs_norm = jnp.logical_or(t_max > 1.0, t_min < 0.0)
    scale = jnp.where(needs_norm, 1.0 / (t_max - t_min + 1e-8), 1.0)
    shift = jnp.where(needs_norm, -t_min * scale, 0.0)

    sum_t_n = scale * sum_t + shift * nf           # sum t'
    sum_pt_n = scale * sum_pt + shift * sum_p      # sum p*t'
    sum_tdl_n = scale * sum_tdl + shift * sum_dl   # sum t'*(log p - log(1-p))

    # BCE element: -(t'*log p + (1-t')*log(1-p)) = -(t'*dlog + log(1-p))
    bce = -(sum_tdl_n + sum_l1mp) / nf
    smooth = 1e-5
    dice = 1.0 - (2.0 * sum_pt_n + smooth) / (sum_p + sum_t_n + smooth)
    return 0.5 * bce + 0.5 * dice


@functools.partial(jax.jit, static_argnames=("max_tile_rows", "chunk_rows"))
def dice_bce_loss(pred, target, *, max_tile_rows=MAX_TILE_ROWS,
                  chunk_rows=CHUNK_ROWS):
    n = pred.size
    p_flat = pred.reshape(-1)      # free (bitcast) flatten, native dtype
    t_flat = target.reshape(-1)

    row_mult = max(_sublane_multiple(pred.dtype), _sublane_multiple(target.dtype))
    rows_all = n // LANES

    tile_rows = 0
    if rows_all >= row_mult:
        tile_rows = min((max_tile_rows // row_mult) * row_mult,
                        (rows_all // row_mult) * row_mult)
    num_tiles = rows_all // tile_rows if tile_rows else 0

    if num_tiles == 0:
        # Smaller than one (row_mult, 128) tile: plain jnp reductions.
        return _finalize(*_stats_jnp(p_flat, t_flat), n)

    # Exact split over the parallel groups; a leftover odd tile (if any) is
    # folded into the JAX tail below so the kernel never needs masking.
    num_groups = NUM_GROUPS if num_tiles >= NUM_GROUPS else 1
    tiles_per_group = num_tiles // num_groups
    covered_rows = num_groups * tiles_per_group * tile_rows
    covered = covered_rows * LANES            # elements handled by the kernel

    if n == rows_all * LANES:
        p2d = p_flat.reshape(rows_all, LANES)     # zero-copy 2-D view
        t2d = t_flat.reshape(rows_all, LANES)
    else:
        # TODO(synk): a fully copy-free ragged path would stream from a flat
        # pl.ANY HBM ref with manual DMA; this contiguous prefix slice may
        # materialize one copy when n is not a multiple of 128.
        p2d = p_flat[:covered].reshape(covered_rows, LANES)
        t2d = t_flat[:covered].reshape(covered_rows, LANES)

    chunk = min(chunk_rows, tile_rows)
    chunk = max(row_mult, (chunk // row_mult) * row_mult)

    kernel = functools.partial(
        _dice_bce_stats_kernel, tile_rows=tile_rows, chunk_rows=chunk,
        tiles_per_group=tiles_per_group)

    in_map = lambda g, j: (g * tiles_per_group + j, 0)
    bytes_accessed = (covered * (p2d.dtype.itemsize + t2d.dtype.itemsize)
                      + num_groups * STAT_ROWS * LANES * 4)

    stats = pl.pallas_call(
        kernel,
        out_shape=jax.ShapeDtypeStruct((num_groups * STAT_ROWS, LANES),
                                       jnp.float32),
        grid=(num_groups, tiles_per_group),
        in_specs=[pl.BlockSpec((tile_rows, LANES), in_map),
                  pl.BlockSpec((tile_rows, LANES), in_map)],
        out_specs=pl.BlockSpec((STAT_ROWS, LANES), lambda g, j: (g, 0)),
        scratch_shapes=[pltpu.VMEM((SUBLANES, LANES), jnp.float32)
                        for _ in range(N_STATS)],
        compiler_params=pltpu.CompilerParams(
            dimension_semantics=("parallel", "arbitrary"),
            vmem_limit_bytes=VMEM_LIMIT_BYTES),
        cost_estimate=pl.CostEstimate(
            flops=15 * covered,
            transcendentals=2 * covered,
            bytes_accessed=bytes_accessed),
    )(p2d, t2d)

    st = stats.reshape(num_groups, N_STATS, SUBLANES, LANES)
    sums = jnp.sum(st[:, :6], axis=(0, 2, 3))
    sum_p, sum_t, sum_pt, sum_l1mp, sum_tdl, sum_dl = [sums[i] for i in range(6)]
    t_min = jnp.min(st[:, 6])
    t_max = jnp.max(st[:, 7])

    if covered < n:
        # Ragged tail (< ~2 tiles + 128 elements) in plain JAX; renorm min/max
        # is taken over the ORIGINAL target values, consistent with the kernel.
        tp, tt, tpt, tl1, ttdl, tdl, tmn, tmx = _stats_jnp(
            p_flat[covered:], t_flat[covered:])
        sum_p = sum_p + tp
        sum_t = sum_t + tt
        sum_pt = sum_pt + tpt
        sum_l1mp = sum_l1mp + tl1
        sum_tdl = sum_tdl + ttdl
        sum_dl = sum_dl + tdl
        t_min = jnp.minimum(t_min, tmn)
        t_max = jnp.maximum(t_max, tmx)

    return _finalize(sum_p, sum_t, sum_pt, sum_l1mp, sum_tdl, sum_dl,
                     t_min, t_max, n)


def _reference(pred, target):
    """Pure-JAX mirror of the PyTorch DiceBCELoss forward."""
    pred = pred.astype(jnp.float32)
    target = target.astype(jnp.float32)
    t_max, t_min = jnp.max(target), jnp.min(target)
    target = jnp.where(
        jnp.logical_or(t_max > 1, t_min < 0),
        (target - t_min) / (t_max - t_min + 1e-8),
        target,
    )
    bce = jnp.mean(
        -(target * jnp.maximum(jnp.log(pred), -100.0)
          + (1.0 - target) * jnp.maximum(jnp.log(1.0 - pred), -100.0))
    )
    smooth = 1e-5
    inter = jnp.sum(pred * target)
    dice = 1.0 - (2.0 * inter + smooth) / (jnp.sum(pred) + jnp.sum(target) + smooth)
    return 0.5 * bce + 0.5 * dice


if __name__ == "__main__":
    key = jax.random.PRNGKey(0)
    k1, k2, k3, k4, k5, k6 = jax.random.split(key, 6)

    # Case 1: canonical segmentation-style inputs (NCHW, f32 preds, int targets).
    shape = (2, 4, 16, 16)
    pred = jax.nn.sigmoid(jax.random.normal(k1, shape, dtype=jnp.float32))
    target = jax.random.bernoulli(k2, p=0.3, shape=shape).astype(jnp.int32)
    loss = jax.block_until_ready(dice_bce_loss(pred, target))
    ref = _reference(pred, target)
    assert jnp.allclose(loss, ref, rtol=1e-4, atol=1e-5), (loss, ref)

    # Case 2: ragged element count (not a multiple of 8*128) with out-of-range
    # targets -> exercises the JAX tail merge and the affine renorm fold.
    shape2 = (3, 5, 7, 11)
    pred2 = jax.nn.sigmoid(jax.random.normal(k3, shape2, dtype=jnp.float32))
    target2 = 3.0 * jax.random.normal(k4, shape2, dtype=jnp.float32)
    loss2 = jax.block_until_ready(dice_bce_loss(pred2, target2))
    ref2 = _reference(pred2, target2)
    assert jnp.allclose(loss2, ref2, rtol=1e-4, atol=1e-4), (loss2, ref2)

    # Case 3: native bf16 preds + int8 targets, multiple tiles, both "parallel"
    # groups, the in-kernel chunk loop and the dropped-odd-tile tail path.
    shape3 = (5, 8, 32, 32)
    pred3 = jax.nn.sigmoid(jax.random.normal(k5, shape3, dtype=jnp.bfloat16))
    target3 = jax.random.bernoulli(k6, p=0.4, shape=shape3).astype(jnp.int8)
    loss3 = jax.block_until_ready(
        dice_bce_loss(pred3, target3, max_tile_rows=64, chunk_rows=32))
    ref3 = _reference(pred3, target3)
    assert jnp.allclose(loss3, ref3, rtol=2e-4, atol=2e-4), (loss3, ref3)

    print("KERNEL_OK")
</pallas_src>

<mosaic_0001>
module attributes {stable_mosaic.version = 11 : i64} {
  func.func @_dice_bce_stats_kernel(%arg0: i32, %arg1: i32, %arg2: memref<16x128xf32, #tpu.memory_space<vmem>>, %arg3: memref<16x128xi32, #tpu.memory_space<vmem>>, %arg4: memref<64x128xf32, #tpu.memory_space<vmem>>, %arg5: memref<8x128xf32, #tpu.memory_space<vmem>>, %arg6: memref<8x128xf32, #tpu.memory_space<vmem>>, %arg7: memref<8x128xf32, #tpu.memory_space<vmem>>, %arg8: memref<8x128xf32, #tpu.memory_space<vmem>>, %arg9: memref<8x128xf32, #tpu.memory_space<vmem>>, %arg10: memref<8x128xf32, #tpu.memory_space<vmem>>, %arg11: memref<8x128xf32, #tpu.memory_space<vmem>>, %arg12: memref<8x128xf32, #tpu.memory_space<vmem>>) attributes {dimension_semantics = [#tpu.dimension_semantics<parallel>, #tpu.dimension_semantics<arbitrary>], iteration_bounds = array<i64: 1, 1>, scalar_prefetch = 0 : i64, scratch_operands = 8 : i64, tpu.core_type = #tpu.core_type<tc>, window_params = [{transform_indices = @transform_0, window_bounds = array<i64: 16, 128>}, {transform_indices = @transform_1, window_bounds = array<i64: 16, 128>}, {transform_indices = @transform_2, window_bounds = array<i64: 64, 128>}]} {
    %c0_i32 = arith.constant 0 : i32
    %0 = arith.cmpi eq, %arg1, %c0_i32 : i32
    %1 = arith.extui %0 : i1 to i32
    %c0_i32_0 = arith.constant 0 : i32
    %2 = arith.cmpi ne, %1, %c0_i32_0 : i32
    scf.if %2 {
      %cst_48 = arith.constant 0.000000e+00 : f32
      %59 = vector.broadcast %cst_48 : f32 to vector<8x128xf32>
      %c0_49 = arith.constant 0 : index
      %c0_50 = arith.constant 0 : index
      %60 = vector.load %arg5[%c0_49, %c0_50] : memref<8x128xf32, #tpu.memory_space<vmem>>, vector<8x128xf32>
      tpu.vector_store %arg5[%c0_49, %c0_50], %59 {strides = array<i32>} : memref<8x128xf32, #tpu.memory_space<vmem>>, vector<8x128xf32>,
      %c0_51 = arith.constant 0 : index
      %c0_52 = arith.constant 0 : index
      %61 = vector.load %arg6[%c0_51, %c0_52] : memref<8x128xf32, #tpu.memory_space<vmem>>, vector<8x128xf32>
      tpu.vector_store %arg6[%c0_51, %c0_52], %59 {strides = array<i32>} : memref<8x128xf32, #tpu.memory_space<vmem>>, vector<8x128xf32>,
      %c0_53 = arith.constant 0 : index
      %c0_54 = arith.constant 0 : index
      %62 = vector.load %arg7[%c0_53, %c0_54] : memref<8x128xf32, #tpu.memory_space<vmem>>, vector<8x128xf32>
      tpu.vector_store %arg7[%c0_53, %c0_54], %59 {strides = array<i32>} : memref<8x128xf32, #tpu.memory_space<vmem>>, vector<8x128xf32>,
      %c0_55 = arith.constant 0 : index
      %c0_56 = arith.constant 0 : index
      %63 = vector.load %arg8[%c0_55, %c0_56] : memref<8x128xf32, #tpu.memory_space<vmem>>, vector<8x128xf32>
      tpu.vector_store %arg8[%c0_55, %c0_56], %59 {strides = array<i32>} : memref<8x128xf32, #tpu.memory_space<vmem>>, vector<8x128xf32>,
      %c0_57 = arith.constant 0 : index
      %c0_58 = arith.constant 0 : index
      %64 = vector.load %arg9[%c0_57, %c0_58] : memref<8x128xf32, #tpu.memory_space<vmem>>, vector<8x128xf32>
      tpu.vector_store %arg9[%c0_57, %c0_58], %59 {strides = array<i32>} : memref<8x128xf32, #tpu.memory_space<vmem>>, vector<8x128xf32>,
      %c0_59 = arith.constant 0 : index
      %c0_60 = arith.constant 0 : index
      %65 = vector.load %arg10[%c0_59, %c0_60] : memref<8x128xf32, #tpu.memory_space<vmem>>, vector<8x128xf32>
      tpu.vector_store %arg10[%c0_59, %c0_60], %59 {strides = array<i32>} : memref<8x128xf32, #tpu.memory_space<vmem>>, vector<8x128xf32>,
      %cst_61 = arith.constant 0x7F800000 : f32
      %66 = vector.broadcast %cst_61 : f32 to vector<8x128xf32>
      %c0_62 = arith.constant 0 : index
      %c0_63 = arith.constant 0 : index
      %67 = vector.load %arg11[%c0_62, %c0_63] : memref<8x128xf32, #tpu.memory_space<vmem>>, vector<8x128xf32>
      tpu.vector_store %arg11[%c0_62, %c0_63], %66 {strides = array<i32>} : memref<8x128xf32, #tpu.memory_space<vmem>>, vector<8x128xf32>,
      %cst_64 = arith.constant 0xFF800000 : f32
      %68 = vector.broadcast %cst_64 : f32 to vector<8x128xf32>
      %c0_65 = arith.constant 0 : index
      %c0_66 = arith.constant 0 : index
      %69 = vector.load %arg12[%c0_65, %c0_66] : memref<8x128xf32, #tpu.memory_space<vmem>>, vector<8x128xf32>
      tpu.vector_store %arg12[%c0_65, %c0_66], %68 {strides = array<i32>} : memref<8x128xf32, #tpu.memory_space<vmem>>, vector<8x128xf32>,
    } else {
    }
    %c0 = arith.constant 0 : index
    %c0_1 = arith.constant 0 : index
    %3 = vector.load %arg2[%c0, %c0_1] : memref<16x128xf32, #tpu.memory_space<vmem>>, vector<16x128xf32>
    %c0_2 = arith.constant 0 : index
    %c0_3 = arith.constant 0 : index
    %4 = vector.load %arg3[%c0_2, %c0_3] : memref<16x128xi32, #tpu.memory_space<vmem>>, vector<16x128xi32>
    %5 = arith.sitofp %4 : vector<16x128xi32> to vector<16x128xf32>
    %6 = math.log %3 : vector<16x128xf32>
    %cst = arith.constant -1.000000e+02 : f32
    %7 = vector.broadcast %cst : f32 to vector<16x128xf32>
    %8 = arith.maximumf %6, %7 : vector<16x128xf32>
    %cst_4 = arith.constant 1.000000e+00 : f32
    %9 = vector.broadcast %cst_4 : f32 to vector<16x128xf32>
    %10 = arith.subf %9, %3 : vector<16x128xf32>
    %11 = math.log %10 : vector<16x128xf32>
    %cst_5 = arith.constant -1.000000e+02 : f32
    %12 = vector.broadcast %cst_5 : f32 to vector<16x128xf32>
    %13 = arith.maximumf %11, %12 : vector<16x128xf32>
    %14 = arith.subf %8, %13 : vector<16x128xf32>
    %c0_6 = arith.constant 0 : index
    %c0_7 = arith.constant 0 : index
    %15 = vector.load %arg5[%c0_6, %c0_7] : memref<8x128xf32, #tpu.memory_space<vmem>>, vector<8x128xf32>
    %16 = vector.shape_cast %3 : vector<16x128xf32> to vector<2x8x128xf32>
    %cst_8 = arith.constant dense<0.000000e+00> : vector<8x128xf32>
    %17 = vector.multi_reduction <add>, %16, %cst_8 [0] : vector<2x8x128xf32> to vector<8x128xf32>
    %18 = arith.addf %15, %17 : vector<8x128xf32>
    %c0_9 = arith.constant 0 : index
    %c0_10 = arith.constant 0 : index
    %19 = vector.load %arg5[%c0_9, %c0_10] : memref<8x128xf32, #tpu.memory_space<vmem>>, vector<8x128xf32>
    tpu.vector_store %arg5[%c0_9, %c0_10], %18 {strides = array<i32>} : memref<8x128xf32, #tpu.memory_space<vmem>>, vector<8x128xf32>,
    %c0_11 = arith.constant 0 : index
    %c0_12 = arith.constant 0 : index
    %20 = vector.load %arg6[%c0_11, %c0_12] : memref<8x128xf32, #tpu.memory_space<vmem>>, vector<8x128xf32>
    %21 = vector.shape_cast %5 : vector<16x128xf32> to vector<2x8x128xf32>
    %cst_13 = arith.constant dense<0.000000e+00> : vector<8x128xf32>
    %22 = vector.multi_reduction <add>, %21, %cst_13 [0] : vector<2x8x128xf32> to vector<8x128xf32>
    %23 = arith.addf %20, %22 : vector<8x128xf32>
    %c0_14 = arith.constant 0 : index
    %c0_15 = arith.constant 0 : index
    %24 = vector.load %arg6[%c0_14, %c0_15] : memref<8x128xf32, #tpu.memory_space<vmem>>, vector<8x128xf32>
    tpu.vector_store %arg6[%c0_14, %c0_15], %23 {strides = array<i32>} : memref<8x128xf32, #tpu.memory_space<vmem>>, vector<8x128xf32>,
    %c0_16 = arith.constant 0 : index
    %c0_17 = arith.constant 0 : index
    %25 = vector.load %arg7[%c0_16, %c0_17] : memref<8x128xf32, #tpu.memory_space<vmem>>, vector<8x128xf32>
    %26 = arith.mulf %3, %5 : vector<16x128xf32>
    %27 = vector.shape_cast %26 : vector<16x128xf32> to vector<2x8x128xf32>
    %cst_18 = arith.constant dense<0.000000e+00> : vector<8x128xf32>
    %28 = vector.multi_reduction <add>, %27, %cst_18 [0] : vector<2x8x128xf32> to vector<8x128xf32>
    %29 = arith.addf %25, %28 : vector<8x128xf32>
    %c0_19 = arith.constant 0 : index
    %c0_20 = arith.constant 0 : index
    %30 = vector.load %arg7[%c0_19, %c0_20] : memref<8x128xf32, #tpu.memory_space<vmem>>, vector<8x128xf32>
    tpu.vector_store %arg7[%c0_19, %c0_20], %29 {strides = array<i32>} : memref<8x128xf32, #tpu.memory_space<vmem>>, vector<8x128xf32>,
    %c0_21 = arith.constant 0 : index
    %c0_22 = arith.constant 0 : index
    %31 = vector.load %arg8[%c0_21, %c0_22] : memref<8x128xf32, #tpu.memory_space<vmem>>, vector<8x128xf32>
    %32 = vector.shape_cast %13 : vector<16x128xf32> to vector<2x8x128xf32>
    %cst_23 = arith.constant dense<0.000000e+00> : vector<8x128xf32>
    %33 = vector.multi_reduction <add>, %32, %cst_23 [0] : vector<2x8x128xf32> to vector<8x128xf32>
    %34 = arith.addf %31, %33 : vector<8x128xf32>
    %c0_24 = arith.constant 0 : index
    %c0_25 = arith.constant 0 : index
    %35 = vector.load %arg8[%c0_24, %c0_25] : memref<8x128xf32, #tpu.memory_space<vmem>>, vector<8x128xf32>
    tpu.vector_store %arg8[%c0_24, %c0_25], %34 {strides = array<i32>} : memref<8x128xf32, #tpu.memory_space<vmem>>, vector<8x128xf32>,
    %c0_26 = arith.constant 0 : index
    %c0_27 = arith.constant 0 : index
    %36 = vector.load %arg9[%c0_26, %c0_27] : memref<8x128xf32, #tpu.memory_space<vmem>>, vector<8x128xf32>
    %37 = arith.mulf %5, %14 : vector<16x128xf32>
    %38 = vector.shape_cast %37 : vector<16x128xf32> to vector<2x8x128xf32>
    %cst_28 = arith.constant dense<0.000000e+00> : vector<8x128xf32>
    %39 = vector.multi_reduction <add>, %38, %cst_28 [0] : vector<2x8x128xf32> to vector<8x128xf32>
    %40 = arith.addf %36, %39 : vector<8x128xf32>
    %c0_29 = arith.constant 0 : index
    %c0_30 = arith.constant 0 : index
    %41 = vector.load %arg9[%c0_29, %c0_30] : memref<8x128xf32, #tpu.memory_space<vmem>>, vector<8x128xf32>
    tpu.vector_store %arg9[%c0_29, %c0_30], %40 {strides = array<i32>} : memref<8x128xf32, #tpu.memory_space<vmem>>, vector<8x128xf32>,
    %c0_31 = arith.constant 0 : index
    %c0_32 = arith.constant 0 : index
    %42 = vector.load %arg10[%c0_31, %c0_32] : memref<8x128xf32, #tpu.memory_space<vmem>>, vector<8x128xf32>
    %43 = vector.shape_cast %14 : vector<16x128xf32> to vector<2x8x128xf32>
    %cst_33 = arith.constant dense<0.000000e+00> : vector<8x128xf32>
    %44 = vector.multi_reduction <add>, %43, %cst_33 [0] : vector<2x8x128xf32> to vector<8x128xf32>
    %45 = arith.addf %42, %44 : vector<8x128xf32>
    %c0_34 = arith.constant 0 : index
    %c0_35 = arith.constant 0 : index
    %46 = vector.load %arg10[%c0_34, %c0_35] : memref<8x128xf32, #tpu.memory_space<vmem>>, vector<8x128xf32>
    tpu.vector_store %arg10[%c0_34, %c0_35], %45 {strides = array<i32>} : memref<8x128xf32, #tpu.memory_space<vmem>>, vector<8x128xf32>,
    %47 = vector.shape_cast %5 : vector<16x128xf32> to vector<2x8x128xf32>
    %c0_36 = arith.constant 0 : index
    %c0_37 = arith.constant 0 : index
    %48 = vector.load %arg11[%c0_36, %c0_37] : memref<8x128xf32, #tpu.memory_space<vmem>>, vector<8x128xf32>
    %cst_38 = arith.constant dense<0x7F800000> : vector<8x128xf32>
    %49 = vector.multi_reduction <minimumf>, %47, %cst_38 [0] : vector<2x8x128xf32> to vector<8x128xf32>
    %50 = arith.minimumf %48, %49 : vector<8x128xf32>
    %c0_39 = arith.constant 0 : index
    %c0_40 = arith.constant 0 : index
    %51 = vector.load %arg11[%c0_39, %c0_40] : memref<8x128xf32, #tpu.memory_space<vmem>>, vector<8x128xf32>
    tpu.vector_store %arg11[%c0_39, %c0_40], %50 {strides = array<i32>} : memref<8x128xf32, #tpu.memory_space<vmem>>, vector<8x128xf32>,
    %c0_41 = arith.constant 0 : index
    %c0_42 = arith.constant 0 : index
    %52 = vector.load %arg12[%c0_41, %c0_42] : memref<8x128xf32, #tpu.memory_space<vmem>>, vector<8x128xf32>
    %cst_43 = arith.constant dense<0xFF800000> : vector<8x128xf32>
    %53 = vector.multi_reduction <maximumf>, %47, %cst_43 [0] : vector<2x8x128xf32> to vector<8x128xf32>
    %54 = arith.maximumf %52, %53 : vector<8x128xf32>
    %c0_44 = arith.constant 0 : index
    %c0_45 = arith.constant 0 : index
    %55 = vector.load %arg12[%c0_44, %c0_45] : memref<8x128xf32, #tpu.memory_space<vmem>>, vector<8x128xf32>
    tpu.vector_store %arg12[%c0_44, %c0_45], %54 {strides = array<i32>} : memref<8x128xf32, #tpu.memory_space<vmem>>, vector<8x128xf32>,
    %c0_i32_46 = arith.constant 0 : i32
    %56 = arith.cmpi eq, %arg1, %c0_i32_46 : i32
    %57 = arith.extui %56 : i1 to i32
    %c0_i32_47 = arith.constant 0 : i32
    %58 = arith.cmpi ne, %57, %c0_i32_47 : i32
    scf.if %58 {
      %c0_48 = arith.constant 0 : index
      %c0_49 = arith.constant 0 : index
      %59 = vector.load %arg5[%c0_48, %c0_49] : memref<8x128xf32, #tpu.memory_space<vmem>>, vector<8x128xf32>
      %c0_50 = arith.constant 0 : index
      %c0_51 = arith.constant 0 : index
      %60 = vector.load %arg4[%c0_50, %c0_51] : memref<64x128xf32, #tpu.memory_space<vmem>>, vector<8x128xf32>
      tpu.vector_store %arg4[%c0_50, %c0_51], %59 {strides = array<i32>} : memref<64x128xf32, #tpu.memory_space<vmem>>, vector<8x128xf32>,
      %c0_52 = arith.constant 0 : index
      %c0_53 = arith.constant 0 : index
      %61 = vector.load %arg6[%c0_52, %c0_53] : memref<8x128xf32, #tpu.memory_space<vmem>>, vector<8x128xf32>
      %c8 = arith.constant 8 : index
      %c0_54 = arith.constant 0 : index
      %62 = vector.load %arg4[%c8, %c0_54] : memref<64x128xf32, #tpu.memory_space<vmem>>, vector<8x128xf32>
      tpu.vector_store %arg4[%c8, %c0_54], %61 {strides = array<i32>} : memref<64x128xf32, #tpu.memory_space<vmem>>, vector<8x128xf32>,
      %c0_55 = arith.constant 0 : index
      %c0_56 = arith.constant 0 : index
      %63 = vector.load %arg7[%c0_55, %c0_56] : memref<8x128xf32, #tpu.memory_space<vmem>>, vector<8x128xf32>
      %c16 = arith.constant 16 : index
      %c0_57 = arith.constant 0 : index
      %64 = vector.load %arg4[%c16, %c0_57] : memref<64x128xf32, #tpu.memory_space<vmem>>, vector<8x128xf32>
      tpu.vector_store %arg4[%c16, %c0_57], %63 {strides = array<i32>} : memref<64x128xf32, #tpu.memory_space<vmem>>, vector<8x128xf32>,
      %c0_58 = arith.constant 0 : index
      %c0_59 = arith.constant 0 : index
      %65 = vector.load %arg8[%c0_58, %c0_59] : memref<8x128xf32, #tpu.memory_space<vmem>>, vector<8x128xf32>
      %c24 = arith.constant 24 : index
      %c0_60 = arith.constant 0 : index
      %66 = vector.load %arg4[%c24, %c0_60] : memref<64x128xf32, #tpu.memory_space<vmem>>, vector<8x128xf32>
      tpu.vector_store %arg4[%c24, %c0_60], %65 {strides = array<i32>} : memref<64x128xf32, #tpu.memory_space<vmem>>, vector<8x128xf32>,
      %c0_61 = arith.constant 0 : index
      %c0_62 = arith.constant 0 : index
      %67 = vector.load %arg9[%c0_61, %c0_62] : memref<8x128xf32, #tpu.memory_space<vmem>>, vector<8x128xf32>
      %c32 = arith.constant 32 : index
      %c0_63 = arith.constant 0 : index
      %68 = vector.load %arg4[%c32, %c0_63] : memref<64x128xf32, #tpu.memory_space<vmem>>, vector<8x128xf32>
      tpu.vector_store %arg4[%c32, %c0_63], %67 {strides = array<i32>} : memref<64x128xf32, #tpu.memory_space<vmem>>, vector<8x128xf32>,
      %c0_64 = arith.constant 0 : index
      %c0_65 = arith.constant 0 : index
      %69 = vector.load %arg10[%c0_64, %c0_65] : memref<8x128xf32, #tpu.memory_space<vmem>>, vector<8x128xf32>
      %c40 = arith.constant 40 : index
      %c0_66 = arith.constant 0 : index
      %70 = vector.load %arg4[%c40, %c0_66] : memref<64x128xf32, #tpu.memory_space<vmem>>, vector<8x128xf32>
      tpu.vector_store %arg4[%c40, %c0_66], %69 {strides = array<i32>} : memref<64x128xf32, #tpu.memory_space<vmem>>, vector<8x128xf32>,
      %c0_67 = arith.constant 0 : index
      %c0_68 = arith.constant 0 : index
      %71 = vector.load %arg11[%c0_67, %c0_68] : memref<8x128xf32, #tpu.memory_space<vmem>>, vector<8x128xf32>
      %c48 = arith.constant 48 : index
      %c0_69 = arith.constant 0 : index
      %72 = vector.load %arg4[%c48, %c0_69] : memref<64x128xf32, #tpu.memory_space<vmem>>, vector<8x128xf32>
      tpu.vector_store %arg4[%c48, %c0_69], %71 {strides = array<i32>} : memref<64x128xf32, #tpu.memory_space<vmem>>, vector<8x128xf32>,
      %c0_70 = arith.constant 0 : index
      %c0_71 = arith.constant 0 : index
      %73 = vector.load %arg12[%c0_70, %c0_71] : memref<8x128xf32, #tpu.memory_space<vmem>>, vector<8x128xf32>
      %c56 = arith.constant 56 : index
      %c0_72 = arith.constant 0 : index
      %74 = vector.load %arg4[%c56, %c0_72] : memref<64x128xf32, #tpu.memory_space<vmem>>, vector<8x128xf32>
      tpu.vector_store %arg4[%c56, %c0_72], %73 {strides = array<i32>} : memref<64x128xf32, #tpu.memory_space<vmem>>, vector<8x128xf32>,
    } else {
    }
    return
  }
  func.func @transform_0(%arg0: i32, %arg1: i32) -> (i32, i32) {
    %c1_i32 = arith.constant 1 : i32
    %0 = arith.muli %arg0, %c1_i32 : i32
    %1 = arith.addi %0, %arg1 : i32
    %c0_i32 = arith.constant 0 : i32
    %c0_i32_0 = arith.constant 0 : i32
    return %1, %c0_i32 : i32, i32
  }
  func.func @transform_1(%arg0: i32, %arg1: i32) -> (i32, i32) {
    %c1_i32 = arith.constant 1 : i32
    %0 = arith.muli %arg0, %c1_i32 : i32
    %1 = arith.addi %0, %arg1 : i32
    %c0_i32 = arith.constant 0 : i32
    %c0_i32_0 = arith.constant 0 : i32
    return %1, %c0_i32 : i32, i32
  }
  func.func @transform_2(%arg0: i32, %arg1: i32) -> (i32, i32) {
    %c0_i32 = arith.constant 0 : i32
    %c0_i32_0 = arith.constant 0 : i32
    return %arg0, %c0_i32 : i32, i32
  }
}

</mosaic_0001>

<llo_original>
// kernel: dice_bce_loss.1
$region0: #{dice_bce_loss.1}
  #allocation0 [shape = 'u32[]', space=smem, size = 0x4, offset = 0x4, fixed_abs, tag = 'smem constant byte address 0x4 - core index']
  #allocation1 [shape = 'u32[144,128]{1,0:T(1,128)}', space=vmem, size = 0x12000, scoped, tag = 'internal scratch']
  #allocation2 [shape = 'f32[8,128]{1,0:T(8,128)}', space=vmem, size = 0x1000, scoped, tag = 'scratch operand']
  #allocation3 [shape = 'f32[8,128]{1,0:T(8,128)}', space=vmem, size = 0x1000, scoped, tag = 'scratch operand']
  #allocation4 [shape = 'f32[8,128]{1,0:T(8,128)}', space=vmem, size = 0x1000, scoped, tag = 'scratch operand']
  #allocation5 [shape = 'f32[8,128]{1,0:T(8,128)}', space=vmem, size = 0x1000, scoped, tag = 'scratch operand']
  #allocation6 [shape = 'f32[8,128]{1,0:T(8,128)}', space=vmem, size = 0x1000, scoped, tag = 'scratch operand']
  #allocation7 [shape = 'f32[8,128]{1,0:T(8,128)}', space=vmem, size = 0x1000, scoped, tag = 'scratch operand']
  #allocation8 [shape = 'f32[8,128]{1,0:T(8,128)}', space=vmem, size = 0x1000, scoped, tag = 'scratch operand']
  #allocation9 [shape = 'f32[8,128]{1,0:T(8,128)}', space=vmem, size = 0x1000, scoped, tag = 'scratch operand']
  %s0 = inlined_call_operand.vmem [shape: f32[16,128], index: 0, kind: input, shape index: {}]
  %s1 = inlined_call_operand.vmem [shape: s32[16,128], index: 1, kind: input, shape index: {}]
  %s2 = inlined_call_operand.vmem [shape: f32[64,128], index: 2, kind: output, shape index: {}]
  %s3 = sld [smem:[#allocation0]]
  $region26: #{dice_bce_loss.1} parent=0
    _
  %s5 = ssub.s32 1, %s3
  %s6 = scalar_select 0, %s5, %s3
  // Predicated region
  $region2: #{dice_bce_loss.1} parent=0 // pred_check
    _
  $region3: #{dice_bce_loss.1} parent=0 // pred_check_branch
    %8 = sbr.rel (0) target = $region5
  $region4: #{dice_bce_loss.1} parent=0 // pred_region
    %s9 = sadd.s32 0, 0
    %s10 = smul.u32 2, %s9
    %p11 = scmp.lt.s32.totalorder %s10, 1
    %s12 = scalar_select %p11, %s10, 1
    %s13 = smul.addr %s12, 8
    %s14 = scalar_lea.vmem %s0, %s13
    %s15 = sadd.s32 0, 0
    %s16 = smul.u32 2, %s15
  $region5: #{dice_bce_loss.1} parent=0 // pred_fallthru
    _
  // Predicated region
  $region6: #{dice_bce_loss.1} parent=0 // pred_check
    _
  $region7: #{dice_bce_loss.1} parent=0 // pred_check_branch
    %18 = sbr.rel (0) target = $region9
  $region8: #{dice_bce_loss.1} parent=0 // pred_region
    %s19 = sadd.s32 0, 0
    %s20 = smul.u32 2, %s19
    %p21 = scmp.lt.s32.totalorder %s20, 1
    %s22 = scalar_select %p21, %s20, 1
    %s23 = smul.addr %s22, 8
    %s24 = scalar_lea.vmem %s1, %s23
    %s25 = sadd.s32 0, 0
    %s26 = smul.u32 2, %s25
  $region9: #{dice_bce_loss.1} parent=0 // pred_fallthru
    _
  %s27 = sadd.s32 0, 0
  %s28 = smul.u32 2, %s27
  %p29 = scmp.lt.s32.totalorder %s28, 1
  %s30 = scalar_select %p29, %s28, 1
  %s31 = smul.addr %s30, 8
  %s32 = scalar_lea.vmem %s0, %s31
  %s33 = sadd.s32 0, 0
  %s34 = smul.u32 2, %s33
  %p35 = scmp.lt.s32.totalorder %s34, 1
  %s36 = scalar_select %p35, %s34, 1
  %s37 = smul.addr %s36, 8
  %s38 = scalar_lea.vmem %s1, %s37
  %s39 = sadd.s32 0, 0
  %s40 = smul.u32 2, %s39
  %p41 = scmp.lt.s32.totalorder %s40, 1
  %s42 = scalar_select %p41, %s40, 1
  %s43 = smul.addr %s42, 8
  %s44 = scalar_lea.vmem %s0, %s43
  %s45 = sadd.s32 0, 0
  %s46 = smul.u32 2, %s45
  %s47 = sadd.s32 0, 0
  %s48 = smul.u32 2, %s47
  %p49 = scmp.lt.s32.totalorder %s48, 1
  %s50 = scalar_select %p49, %s48, 1
  %s51 = smul.addr %s50, 8
  %s52 = scalar_lea.vmem %s1, %s51
  %s53 = sadd.s32 0, 0
  %s54 = smul.u32 2, %s53
  %p55 = scmp.eq.s32.totalorder 0, 0
  // Predicated region
  $region10: #{dice_bce_loss.1} parent=0 // pred_check
    %p56 = pneg %p55
  $region11: #{dice_bce_loss.1} parent=0 // pred_check_branch
    %58 = sbr.rel (%p56) target = $region13
  $region12: #{dice_bce_loss.1} parent=0 // pred_region
    %59 = vst [vmem:[#allocation2] sm:$0xff] 0.0
    %60 = vst [vmem:[#allocation3] sm:$0xff] 0.0
    %61 = vst [vmem:[#allocation4] sm:$0xff] 0.0
    %62 = vst [vmem:[#allocation5] sm:$0xff] 0.0
    %63 = vst [vmem:[#allocation6] sm:$0xff] 0.0
    %64 = vst [vmem:[#allocation7] sm:$0xff] 0.0
    %65 = vst [vmem:[#allocation8] sm:$0xff] inf
    %66 = vst [vmem:[#allocation9] sm:$0xff] -inf
  $region13: #{dice_bce_loss.1} parent=0 // pred_fallthru
    _
  %v67 = vld [vmem:[%s44] sm:$0xff]
  %v68 = vld [vmem:[%s44 + $0x8] sm:$0xff]
  %v69 = vld [vmem:[%s52] sm:$0xff]
  %v70 = vld [vmem:[%s52 + $0x8] sm:$0xff]
  %v71 = vcvt.s32.f32 %v69
  %v72 = vcvt.s32.f32 %v70
  %v73 = vlog2.pop %v67
  %v74 = vmul.f32 %v73, 0.6931472
  %v75 = vlog2.pop %v68
  %v76 = vmul.f32 %v75, 0.6931472
  %v77 = vmax.f32 %v74, -100.0
  %v78 = vmax.f32 %v76, -100.0
  %v79 = vsub.f32 1.0, %v67
  %v80 = vsub.f32 1.0, %v68
  %v81 = vlog2.pop %v79
  %v82 = vmul.f32 %v81, 0.6931472
  %v83 = vlog2.pop %v80
  %v84 = vmul.f32 %v83, 0.6931472
  %v85 = vmax.f32 %v82, -100.0
  %v86 = vmax.f32 %v84, -100.0
  %v87 = vsub.f32 %v77, %v85
  %v88 = vsub.f32 %v78, %v86
  %v89 = vld [vmem:[#allocation2] sm:$0xff]
  %v90 = vadd.f32 %v67, %v68
  %v91 = vadd.f32 %v89, %v90
  %92 = vst [vmem:[#allocation2] sm:$0xff] %v91
  %v93 = vld [vmem:[#allocation3] sm:$0xff]
  %v94 = vadd.f32 %v71, %v72
  %v95 = vadd.f32 %v93, %v94
  %96 = vst [vmem:[#allocation3] sm:$0xff] %v95
  %v97 = vld [vmem:[#allocation4] sm:$0xff]
  %v98 = vmul.f32 %v67, %v71
  %v99 = vmul.f32 %v68, %v72
  %v100 = vadd.f32 %v98, %v99
  %v101 = vadd.f32 %v97, %v100
  %102 = vst [vmem:[#allocation4] sm:$0xff] %v101
  %v103 = vld [vmem:[#allocation5] sm:$0xff]
  %v104 = vadd.f32 %v85, %v86
  %v105 = vadd.f32 %v103, %v104
  %106 = vst [vmem:[#allocation5] sm:$0xff] %v105
  %v107 = vld [vmem:[#allocation6] sm:$0xff]
  %v108 = vmul.f32 %v71, %v87
  %v109 = vmul.f32 %v72, %v88
  %v110 = vadd.f32 %v108, %v109
  %v111 = vadd.f32 %v107, %v110
  %112 = vst [vmem:[#allocation6] sm:$0xff] %v111
  %v113 = vld [vmem:[#allocation7] sm:$0xff]
  %v114 = vadd.f32 %v87, %v88
  %v115 = vadd.f32 %v113, %v114
  %116 = vst [vmem:[#allocation7] sm:$0xff] %v115
  %v117 = vld [vmem:[#allocation8] sm:$0xff]
  %v118 = vmin.f32 %v71, %v72
  %v119 = vmin.f32 %v117, %v118
  %120 = vst [vmem:[#allocation8] sm:$0xff] %v119
  %v121 = vld [vmem:[#allocation9] sm:$0xff]
  %v122 = vmax.f32 %v71, %v72
  %v123 = vmax.f32 %v121, %v122
  %124 = vst [vmem:[#allocation9] sm:$0xff] %v123
  // Predicated region
  $region14: #{dice_bce_loss.1} parent=0 // pred_check
    %p125 = pneg %p55
  $region15: #{dice_bce_loss.1} parent=0 // pred_check_branch
    %127 = sbr.rel (%p125) target = $region17
  $region16: #{dice_bce_loss.1} parent=0 // pred_region
    %v128 = vld [vmem:[#allocation2] sm:$0xff]
    %129 = vst [vmem:[%s2] sm:$0xff] %v128
    %v130 = vld [vmem:[#allocation3] sm:$0xff]
    %131 = vst [vmem:[%s2 + $0x8] sm:$0xff] %v130
    %v132 = vld [vmem:[#allocation4] sm:$0xff]
    %133 = vst [vmem:[%s2 + $0x10] sm:$0xff] %v132
    %v134 = vld [vmem:[#allocation5] sm:$0xff]
    %135 = vst [vmem:[%s2 + $0x18] sm:$0xff] %v134
    %v136 = vld [vmem:[#allocation6] sm:$0xff]
    %137 = vst [vmem:[%s2 + $0x20] sm:$0xff] %v136
    %v138 = vld [vmem:[#allocation7] sm:$0xff]
    %139 = vst [vmem:[%s2 + $0x28] sm:$0xff] %v138
    %v140 = vld [vmem:[#allocation8] sm:$0xff]
    %141 = vst [vmem:[%s2 + $0x30] sm:$0xff] %v140
    %v142 = vld [vmem:[#allocation9] sm:$0xff]
    %143 = vst [vmem:[%s2 + $0x38] sm:$0xff] %v142
  $region17: #{dice_bce_loss.1} parent=0 // pred_fallthru
    _
  // Predicated region
  $region18: #{dice_bce_loss.1} parent=0 // pred_check
    _
  $region19: #{dice_bce_loss.1} parent=0 // pred_check_branch
    %145 = sbr.rel (0) target = $region21
  $region20: #{dice_bce_loss.1} parent=0 // pred_region
    _
  $region21: #{dice_bce_loss.1} parent=0 // pred_fallthru
    _
  // Predicated region
  $region22: #{dice_bce_loss.1} parent=0 // pred_check
    _
  $region23: #{dice_bce_loss.1} parent=0 // pred_check_branch
    %147 = sbr.rel (0) target = $region25
  $region24: #{dice_bce_loss.1} parent=0 // pred_region
    _
  $region25: #{dice_bce_loss.1} parent=0 // pred_fallthru
    _

</llo_original>
